<compile_context>
chip_gen: v6e
topology: v6e:2x2x1
jax: 0.10.0
libtpu: 0.0.40
codegen_flags: <defaults>
</compile_context>

<pallas_src>
import functools
import math

import jax
import jax.numpy as jnp
from jax import lax
from jax.experimental import pallas as pl
from jax.experimental.pallas import tpu as pltpu


def _l2_normalize(x, eps=1e-12):
    # torch.nn.functional.normalize(p=2, dim=-1): x / max(||x||_2, eps)
    x = x.astype(jnp.float32)
    sumsq = jnp.sum(x * x, axis=-1, keepdims=True)
    return x * lax.rsqrt(jnp.maximum(sumsq, eps * eps))


def _arcface_kernel(h1_ref, h2t_ref, rowloss_ref, row_sum_ref, diag_m_ref, *,
                    inv_temp, cos_margin, sin_margin, acc_width, exp_dtype):
    i = pl.program_id(0)          # row tile (parallel / megacore)
    j = pl.program_id(1)          # col tile (online reduction, innermost)

    @pl.when(j == 0)
    def _():
        row_sum_ref[...] = jnp.zeros_like(row_sum_ref)
        diag_m_ref[...] = jnp.zeros_like(diag_m_ref)

    h1 = h1_ref[...]              # (TM, D)  matmul_dtype (pre-normalized)
    h2t = h2t_ref[...]            # (D, TN)  matmul_dtype (pre-normalized, pre-transposed)

    # Standard (M,K)x(K,N) MXU contraction, f32 accumulation.
    cos_blk = jnp.dot(h1, h2t, preferred_element_type=jnp.float32)   # (TM, TN)
    tm, tn = cos_blk.shape

    # Global row/col ids -> diagonal mask (only ever true when i == j since the
    # grid is square with TM == TN).  Standard causal-mask-style iota compare.
    row_gid = i * tm + lax.broadcasted_iota(jnp.int32, (tm, tn), 0)
    col_gid = j * tn + lax.broadcasted_iota(jnp.int32, (tm, tn), 1)
    on_diag = row_gid == col_gid

    z = cos_blk * inv_temp
    if jnp.dtype(exp_dtype) == jnp.dtype(jnp.float32):
        e = jnp.exp(z)
    else:
        # v6e/v7x only: bf16 EUP runs ~2x the f32 rate; ~0.4%/term precision cost.
        e = jnp.exp(z.astype(exp_dtype)).astype(jnp.float32)
    e = jnp.where(on_diag, 0.0, e)          # mask the positive pair out of the sum

    # Lane-dense accumulation: pure VPU adds across 128-wide slices; the single
    # cross-lane reduce to (TM, 1) is deferred to the epilogue.
    acc = row_sum_ref[...]
    for c in range(tn // acc_width):
        acc = acc + e[:, c * acc_width:(c + 1) * acc_width]
    row_sum_ref[...] = acc

    # Positive-pair (diagonal) margin term: extracted once per row tile from the
    # f32-accumulated cos block, so numerator and denominator are consistent.
    @pl.when(i == j)
    def _():
        diag_cos = jnp.sum(jnp.where(on_diag, cos_blk, 0.0), axis=1, keepdims=True)
        # Clamp: rounding can push cos^2 slightly above 1 (torch would NaN here).
        sin_d = jnp.sqrt(jnp.maximum(1.0 - diag_cos * diag_cos, 0.0))
        diag_m_ref[...] = diag_cos * cos_margin - sin_d * sin_margin

    @pl.when(j == pl.num_programs(1) - 1)
    def _():
        diag_m = diag_m_ref[...]
        denom = (jnp.sum(row_sum_ref[...], axis=1, keepdims=True)
                 + jnp.exp(diag_m * inv_temp))
        # -log(num/denom) = log(denom) - log(num) = log(denom) - diag_m / T
        rowloss_ref[...] = jnp.log(denom) - diag_m * inv_temp


def _vmem_budget():
    try:
        phys = int(pltpu.get_tpu_info().vmem_capacity_bytes)
        if phys <= 0:
            raise ValueError
    except Exception:
        phys = 64 << 20   # conservative fallback: v7x has the smallest VMEM (64 MiB/TC)
    return int(phys * 0.6)


def _estimate_vmem(tm, D, in_itemsize):
    tn = tm
    accw = 128 if tn % 128 == 0 else tn
    inputs = 2 * 2 * (tm + tn) * D * in_itemsize   # double-buffered h1 / h2 tiles
    temps = 6 * tm * tn * 4                        # cos / exp / mask f32 block temps
    scratch = (tm * accw + 2 * tm + 2 * tm) * 4    # accumulators + row outputs
    return inputs + temps + scratch + (2 << 20)


def _pick_block_rows(B, D, in_itemsize, vmem_budget):
    # Candidates must keep the (D, TN) h2^T block lane-legal: TN % 128 == 0 or TN == B.
    cands = sorted({t for t in (B, B // 2, 2048, 1024, 512, 256, 128)
                    if t >= 1 and B % t == 0 and (t == B or t % 128 == 0)},
                   reverse=True)
    fits = [t for t in cands if _estimate_vmem(t, D, in_itemsize) <= vmem_budget]
    if fits:
        tm = fits[0]
        if B // tm < 2:
            # v7x megacore: prefer >= 2 programs on the parallel (row) axis when
            # the halves are still tile-legal and reasonably large.
            halves = [t for t in fits if t <= B // 2 and t >= 128]
            if halves:
                tm = halves[0]
    else:
        # TODO(synk): for huge B with awkward divisors nothing fits the budget;
        # fall back to the smallest legal tile and let the compiler try.
        tm = min(cands)
    return tm, _estimate_vmem(tm, D, in_itemsize)


def arcface_loss(hidden1, hidden2, *, temperature, m=0.5, block_rows=None,
                 matmul_dtype=jnp.bfloat16, exp_dtype=jnp.float32):
    """Pallas implementation of ArcFace.forward(hidden1, hidden2) -> scalar loss.

    matmul_dtype=jnp.bfloat16 (default) keeps f32 accumulation / exp / log; pass
    jnp.float32 for bit-tight numerics.  exp_dtype=jnp.bfloat16 is a v6e/v7x-only
    EUP optimization (do not use on v5e).
    """
    B, D = hidden1.shape
    assert hidden2.shape == (B, D)

    # Normalize once in the wrapper (O(B*D); the kernel does the O(B^2*D) work).
    h1n = _l2_normalize(hidden1).astype(matmul_dtype)            # (B, D)
    h2t = _l2_normalize(hidden2).astype(matmul_dtype).T          # (D, B)

    in_itemsize = jnp.dtype(matmul_dtype).itemsize
    vmem_budget = _vmem_budget()
    if block_rows is None:
        TM, vmem_need = _pick_block_rows(B, D, in_itemsize, vmem_budget)
    else:
        TM = int(block_rows)
        assert B % TM == 0 and (TM == B or TM % 128 == 0), \
            "block_rows must divide B and be a multiple of 128 (or equal B)"
        vmem_need = _estimate_vmem(TM, D, in_itemsize)
    TN = TM
    ACCW = 128 if TN % 128 == 0 else TN
    grid = (B // TM, B // TN)

    vmem_limit = int(max(min(vmem_budget, 100 << 20), vmem_need + (1 << 20)))

    kernel = functools.partial(
        _arcface_kernel,
        inv_temp=float(1.0 / temperature),
        cos_margin=float(math.cos(m)),
        sin_margin=float(math.sin(m)),
        acc_width=ACCW,
        exp_dtype=exp_dtype,
    )

    row_loss = pl.pallas_call(
        kernel,
        out_shape=jax.ShapeDtypeStruct((B, 1), jnp.float32),
        grid_spec=pltpu.PrefetchScalarGridSpec(
            num_scalar_prefetch=0,
            grid=grid,
            in_specs=[
                pl.BlockSpec((TM, D), lambda i, j: (i, 0)),   # normalized h1
                pl.BlockSpec((D, TN), lambda i, j: (0, j)),   # normalized h2^T
            ],
            out_specs=pl.BlockSpec((TM, 1), lambda i, j: (i, 0)),
            scratch_shapes=[
                pltpu.VMEM((TM, ACCW), jnp.float32),  # lane-dense running denominator
                pltpu.VMEM((TM, 1), jnp.float32),     # cos_theta_m on the diagonal
            ],
        ),
        compiler_params=pltpu.CompilerParams(
            dimension_semantics=("parallel", "arbitrary"),
            vmem_limit_bytes=vmem_limit,
        ),
        cost_estimate=pl.CostEstimate(
            flops=2 * B * B * D,
            transcendentals=B * B + 4 * B,
            # h1 read once, h2^T re-streamed once per row tile, tiny row output.
            bytes_accessed=int(B * D * in_itemsize * (1 + B // TM) + B * 4),
        ),
    )(h1n, h2t)

    # Tiny final reduction (B floats) done in XLA.
    return jnp.mean(row_loss)


def _arcface_ref(hidden1, hidden2, *, temperature, m=0.5):
    """Pure-JAX reference mirroring the PyTorch forward (for correctness check)."""
    cos_m = math.cos(m)
    sin_m = math.sin(m)
    eps = 1e-12
    h1 = hidden1 / jnp.maximum(jnp.linalg.norm(hidden1, axis=-1, keepdims=True), eps)
    h2 = hidden2 / jnp.maximum(jnp.linalg.norm(hidden2, axis=-1, keepdims=True), eps)
    cos_theta = h1 @ h2.T
    mask = jnp.eye(h1.shape[0], dtype=jnp.float32)
    sin_theta = jnp.sqrt(1.0 - cos_theta ** 2)
    cos_theta_m = cos_theta * cos_m - sin_theta * sin_m
    num = jnp.sum(mask * jnp.exp(cos_theta_m / temperature), axis=1)
    denom = num + jnp.sum((1.0 - mask) * jnp.exp(cos_theta / temperature), axis=1)
    return jnp.mean(-jnp.log(num / denom))


if __name__ == "__main__":
    # ArcFace(temperature=0.07, m=0.5); mixup flags are unused in forward.
    temperature = 0.07
    margin = 0.5

    B, D = 8, 32  # small embedding batch (collapses to a (1,1) grid)
    key = jax.random.PRNGKey(0)
    k1, k2 = jax.random.split(key)
    hidden1 = jax.random.normal(k1, (B, D), dtype=jnp.float32)
    hidden2 = jax.random.normal(k2, (B, D), dtype=jnp.float32)

    ref = _arcface_ref(hidden1, hidden2, temperature=temperature, m=margin)

    # Tight check with f32 MXU operands.
    loss_f32 = arcface_loss(hidden1, hidden2, temperature=temperature, m=margin,
                            matmul_dtype=jnp.float32)
    loss_f32 = jax.block_until_ready(loss_f32)
    assert jnp.allclose(loss_f32, ref, rtol=1e-4, atol=1e-4), (loss_f32, ref)

    # Default fast path: bf16 MXU operands, f32 accumulation / exp / log.
    loss_bf16 = arcface_loss(hidden1, hidden2, temperature=temperature, m=margin)
    loss_bf16 = jax.block_until_ready(loss_bf16)
    assert jnp.allclose(loss_bf16, ref, rtol=5e-2, atol=5e-2), (loss_bf16, ref)

    print("KERNEL_OK")
</pallas_src>

<mosaic_0001>
module attributes {stable_mosaic.version = 11 : i64} {
  func.func @_arcface_kernel(%arg0: i32, %arg1: i32, %arg2: memref<8x32xf32, #tpu.memory_space<vmem>>, %arg3: memref<32x8xf32, #tpu.memory_space<vmem>>, %arg4: memref<8x1xf32, #tpu.memory_space<vmem>>, %arg5: memref<8x8xf32, #tpu.memory_space<vmem>>, %arg6: memref<8x1xf32, #tpu.memory_space<vmem>>) attributes {dimension_semantics = [#tpu.dimension_semantics<parallel>, #tpu.dimension_semantics<arbitrary>], iteration_bounds = array<i64: 1, 1>, scalar_prefetch = 0 : i64, scratch_operands = 2 : i64, tpu.core_type = #tpu.core_type<tc>, window_params = [{transform_indices = @transform_0, window_bounds = array<i64: 8, 32>}, {transform_indices = @transform_1, window_bounds = array<i64: 32, 8>}, {transform_indices = @transform_2, window_bounds = array<i64: 8, 1>}]} {
    %c0_i32 = arith.constant 0 : i32
    %0 = arith.cmpi eq, %arg1, %c0_i32 : i32
    %1 = arith.extui %0 : i1 to i32
    %c0_i32_0 = arith.constant 0 : i32
    %2 = arith.cmpi ne, %1, %c0_i32_0 : i32
    scf.if %2 {
      %cst_14 = arith.constant 0.000000e+00 : f32
      %29 = vector.broadcast %cst_14 : f32 to vector<8x8xf32>
      %c0_15 = arith.constant 0 : index
      %c0_16 = arith.constant 0 : index
      %30 = vector.load %arg5[%c0_15, %c0_16] : memref<8x8xf32, #tpu.memory_space<vmem>>, vector<8x8xf32>
      tpu.vector_store %arg5[%c0_15, %c0_16], %29 {strides = array<i32>} : memref<8x8xf32, #tpu.memory_space<vmem>>, vector<8x8xf32>,
      %cst_17 = arith.constant 0.000000e+00 : f32
      %31 = vector.broadcast %cst_17 : f32 to vector<8x1xf32>
      %c0_18 = arith.constant 0 : index
      %c0_19 = arith.constant 0 : index
      %32 = vector.load %arg6[%c0_18, %c0_19] : memref<8x1xf32, #tpu.memory_space<vmem>>, vector<8x1xf32>
      tpu.vector_store %arg6[%c0_18, %c0_19], %31 {strides = array<i32>} : memref<8x1xf32, #tpu.memory_space<vmem>>, vector<8x1xf32>,
    } else {
    }
    %c0 = arith.constant 0 : index
    %c0_1 = arith.constant 0 : index
    %3 = vector.load %arg2[%c0, %c0_1] : memref<8x32xf32, #tpu.memory_space<vmem>>, vector<8x32xf32>
    %c0_2 = arith.constant 0 : index
    %c0_3 = arith.constant 0 : index
    %4 = vector.load %arg3[%c0_2, %c0_3] : memref<32x8xf32, #tpu.memory_space<vmem>>, vector<32x8xf32>
    %cst = arith.constant dense<0.000000e+00> : vector<8x8xf32>
    %5 = tpu.matmul %3, %4, %cst {dimension_numbers = #tpu.dot_dimension_numbers<[1], [0], [0], [1], [0, 0, 1, 1], [], []>} : vector<8x32xf32>, vector<32x8xf32>, vector<8x8xf32> -> vector<8x8xf32>
    %c8_i32 = arith.constant 8 : i32
    %6 = arith.muli %arg0, %c8_i32 : i32
    %7 = tpu.iota {dimensions = array<i32: 0>} : vector<8x8xi32>
    %8 = vector.broadcast %6 : i32 to vector<8x8xi32>
    %9 = arith.addi %8, %7 : vector<8x8xi32>
    %c8_i32_4 = arith.constant 8 : i32
    %10 = arith.muli %arg1, %c8_i32_4 : i32
    %11 = tpu.iota {dimensions = array<i32: 1>} : vector<8x8xi32>
    %12 = vector.broadcast %10 : i32 to vector<8x8xi32>
    %13 = arith.addi %12, %11 : vector<8x8xi32>
    %14 = arith.cmpi eq, %9, %13 : vector<8x8xi32>
    %cst_5 = arith.constant 14.2857141 : f32
    %15 = vector.broadcast %cst_5 : f32 to vector<8x8xf32>
    %16 = arith.mulf %5, %15 : vector<8x8xf32>
    %17 = math.exp %16 : vector<8x8xf32>
    %cst_6 = arith.constant 0.000000e+00 : f32
    %18 = vector.broadcast %cst_6 : f32 to vector<8x8xf32>
    %19 = arith.select %14, %18, %17 : vector<8x8xi1>, vector<8x8xf32>
    %c0_7 = arith.constant 0 : index
    %c0_8 = arith.constant 0 : index
    %20 = vector.load %arg5[%c0_7, %c0_8] : memref<8x8xf32, #tpu.memory_space<vmem>>, vector<8x8xf32>
    %21 = arith.addf %20, %19 : vector<8x8xf32>
    %c0_9 = arith.constant 0 : index
    %c0_10 = arith.constant 0 : index
    %22 = vector.load %arg5[%c0_9, %c0_10] : memref<8x8xf32, #tpu.memory_space<vmem>>, vector<8x8xf32>
    tpu.vector_store %arg5[%c0_9, %c0_10], %21 {strides = array<i32>} : memref<8x8xf32, #tpu.memory_space<vmem>>, vector<8x8xf32>,
    %23 = arith.cmpi eq, %arg0, %arg1 : i32
    %24 = arith.extui %23 : i1 to i32
    %c0_i32_11 = arith.constant 0 : i32
    %25 = arith.cmpi ne, %24, %c0_i32_11 : i32
    scf.if %25 {
      %cst_14 = arith.constant 0.000000e+00 : f32
      %29 = vector.broadcast %cst_14 : f32 to vector<8x8xf32>
      %30 = arith.select %14, %5, %29 : vector<8x8xi1>, vector<8x8xf32>
      %cst_15 = arith.constant dense<0.000000e+00> : vector<8xf32>
      %31 = vector.multi_reduction <add>, %30, %cst_15 [1] : vector<8x8xf32> to vector<8xf32>
      %32 = vector.shape_cast %31 : vector<8xf32> to vector<8x1xf32>
      %33 = arith.mulf %32, %32 : vector<8x1xf32>
      %cst_16 = arith.constant 1.000000e+00 : f32
      %34 = vector.broadcast %cst_16 : f32 to vector<8x1xf32>
      %35 = arith.subf %34, %33 : vector<8x1xf32>
      %cst_17 = arith.constant 0.000000e+00 : f32
      %36 = vector.broadcast %cst_17 : f32 to vector<8x1xf32>
      %37 = arith.maximumf %35, %36 : vector<8x1xf32>
      %38 = math.sqrt %37 : vector<8x1xf32>
      %cst_18 = arith.constant 0.87758255 : f32
      %39 = vector.broadcast %cst_18 : f32 to vector<8x1xf32>
      %40 = arith.mulf %32, %39 : vector<8x1xf32>
      %cst_19 = arith.constant 0.47942555 : f32
      %41 = vector.broadcast %cst_19 : f32 to vector<8x1xf32>
      %42 = arith.mulf %38, %41 : vector<8x1xf32>
      %43 = arith.subf %40, %42 : vector<8x1xf32>
      %c0_20 = arith.constant 0 : index
      %c0_21 = arith.constant 0 : index
      %44 = vector.load %arg6[%c0_20, %c0_21] : memref<8x1xf32, #tpu.memory_space<vmem>>, vector<8x1xf32>
      tpu.vector_store %arg6[%c0_20, %c0_21], %43 {strides = array<i32>} : memref<8x1xf32, #tpu.memory_space<vmem>>, vector<8x1xf32>,
    } else {
    }
    %c0_i32_12 = arith.constant 0 : i32
    %26 = arith.cmpi eq, %arg1, %c0_i32_12 : i32
    %27 = arith.extui %26 : i1 to i32
    %c0_i32_13 = arith.constant 0 : i32
    %28 = arith.cmpi ne, %27, %c0_i32_13 : i32
    scf.if %28 {
      %c0_14 = arith.constant 0 : index
      %c0_15 = arith.constant 0 : index
      %29 = vector.load %arg6[%c0_14, %c0_15] : memref<8x1xf32, #tpu.memory_space<vmem>>, vector<8x1xf32>
      %c0_16 = arith.constant 0 : index
      %c0_17 = arith.constant 0 : index
      %30 = vector.load %arg5[%c0_16, %c0_17] : memref<8x8xf32, #tpu.memory_space<vmem>>, vector<8x8xf32>
      %cst_18 = arith.constant dense<0.000000e+00> : vector<8xf32>
      %31 = vector.multi_reduction <add>, %30, %cst_18 [1] : vector<8x8xf32> to vector<8xf32>
      %32 = vector.shape_cast %31 : vector<8xf32> to vector<8x1xf32>
      %cst_19 = arith.constant 14.2857141 : f32
      %33 = vector.broadcast %cst_19 : f32 to vector<8x1xf32>
      %34 = arith.mulf %29, %33 : vector<8x1xf32>
      %35 = math.exp %34 : vector<8x1xf32>
      %36 = arith.addf %32, %35 : vector<8x1xf32>
      %37 = math.log %36 : vector<8x1xf32>
      %cst_20 = arith.constant 14.2857141 : f32
      %38 = vector.broadcast %cst_20 : f32 to vector<8x1xf32>
      %39 = arith.mulf %29, %38 : vector<8x1xf32>
      %40 = arith.subf %37, %39 : vector<8x1xf32>
      %c0_21 = arith.constant 0 : index
      %c0_22 = arith.constant 0 : index
      %41 = vector.load %arg4[%c0_21, %c0_22] : memref<8x1xf32, #tpu.memory_space<vmem>>, vector<8x1xf32>
      tpu.vector_store %arg4[%c0_21, %c0_22], %40 {strides = array<i32>} : memref<8x1xf32, #tpu.memory_space<vmem>>, vector<8x1xf32>,
    } else {
    }
    return
  }
  func.func @transform_0(%arg0: i32, %arg1: i32) -> (i32, i32) {
    %c0_i32 = arith.constant 0 : i32
    %c0_i32_0 = arith.constant 0 : i32
    return %arg0, %c0_i32 : i32, i32
  }
  func.func @transform_1(%arg0: i32, %arg1: i32) -> (i32, i32) {
    %c0_i32 = arith.constant 0 : i32
    %c0_i32_0 = arith.constant 0 : i32
    return %c0_i32, %arg1 : i32, i32
  }
  func.func @transform_2(%arg0: i32, %arg1: i32) -> (i32, i32) {
    %c0_i32 = arith.constant 0 : i32
    %c0_i32_0 = arith.constant 0 : i32
    return %arg0, %c0_i32 : i32, i32
  }
}

</mosaic_0001>

<llo_original>
// kernel: tpu_custom_call.1
$region0: #{tpu_custom_call.1}
  #allocation0 [shape = 'u32[]', space=smem, size = 0x4, offset = 0x4, fixed_abs, tag = 'smem constant byte address 0x4 - core index']
  #allocation1 [shape = 'u32[144,128]{1,0:T(1,128)}', space=vmem, size = 0x12000, scoped, tag = 'internal scratch']
  #allocation2 [shape = 'f32[8,8]{1,0:T(8,128)}', space=vmem, size = 0x1000, scoped, tag = 'scratch operand']
  #allocation3 [shape = 'f32[8,1]{1,0:T(8,128)}', space=vmem, size = 0x1000, scoped, tag = 'scratch operand']
  %s0 = inlined_call_operand.vmem [shape: f32[8,32], index: 0, kind: input, shape index: {}]
  %s1 = inlined_call_operand.vmem [shape: f32[32,8], index: 1, kind: input, shape index: {}]
  %s2 = inlined_call_operand.vmem [shape: f32[8,1], index: 2, kind: output, shape index: {}]
  %s3 = sld [smem:[#allocation0]]
  $region30: #{tpu_custom_call.1} parent=0
    _
  %s5 = ssub.s32 1, %s3
  %s6 = scalar_select 0, %s5, %s3
  // Predicated region
  $region2: #{tpu_custom_call.1} parent=0 // pred_check
    _
  $region3: #{tpu_custom_call.1} parent=0 // pred_check_branch
    %8 = sbr.rel (0) target = $region5
  $region4: #{tpu_custom_call.1} parent=0 // pred_region
    _
  $region5: #{tpu_custom_call.1} parent=0 // pred_fallthru
    _
  // Predicated region
  $region6: #{tpu_custom_call.1} parent=0 // pred_check
    _
  $region7: #{tpu_custom_call.1} parent=0 // pred_check_branch
    %10 = sbr.rel (0) target = $region9
  $region8: #{tpu_custom_call.1} parent=0 // pred_region
    _
  $region9: #{tpu_custom_call.1} parent=0 // pred_fallthru
    _
  %p11 = scmp.eq.s32.totalorder 0, 0
  // Predicated region
  $region10: #{tpu_custom_call.1} parent=0 // pred_check
    %p12 = pneg %p11
  $region11: #{tpu_custom_call.1} parent=0 // pred_check_branch
    %14 = sbr.rel (%p12) target = $region13
  $region12: #{tpu_custom_call.1} parent=0 // pred_region
    %vm15 = vcmask 64512
    %16 = vst.msk [vmem:[#allocation2] sm:$0xff] %vm15, 0.0
    %vm17 = vcmask 7168
    %18 = vst.msk [vmem:[#allocation3] sm:$0xff] %vm17, 0.0
  $region13: #{tpu_custom_call.1} parent=0 // pred_fallthru
    _
  %v19 = vld [vmem:[%s0] sm:$0xff]
  %v20 = vld [vmem:[%s1] sm:$0xff]
  %v21 = vld [vmem:[%s1 + $0x8] sm:$0xff]
  %v22 = vld [vmem:[%s1 + $0x10] sm:$0xff]
  %v23 = vld [vmem:[%s1 + $0x18] sm:$0xff]
  %vm24 = vcmask 261120
  %v26 = vsel %vm24, %v19, 0
  %28 = vmatprep.subr.mxu0 0.0
  %29 = vmatpush1.msra.mxu0 0.0
  %30 = vmatprep.subr.mxu0 0.0
  %31 = vmatpush1.msra.mxu0 0.0
  %32 = vmatprep.subr.mxu0 0.0
  %33 = vmatpush1.msra.mxu0 0.0
  %34 = vmatprep.subr.mxu0 0.0
  %35 = vmatpush1.msra.mxu0 0.0
  %36 = vmatprep.subr.mxu0 0.0
  %37 = vmatpush1.msra.mxu0 0.0
  %38 = vmatprep.subr.mxu0 0.0
  %39 = vmatpush1.msra.mxu0 0.0
  %40 = vmatprep.subr.mxu0 0.0
  %41 = vmatpush1.msra.mxu0 0.0
  %42 = vmatprep.subr.mxu0 0.0
  %43 = vmatpush1.msra.mxu0 0.0
  %44 = vmatprep.subr.mxu0 0.0
  %45 = vmatpush1.msra.mxu0 0.0
  %46 = vmatprep.subr.mxu0 0.0
  %47 = vmatpush1.msra.mxu0 0.0
  %48 = vmatprep.subr.mxu0 0.0
  %49 = vmatpush1.msra.mxu0 0.0
  %50 = vmatprep.subr.mxu0 0.0
  %51 = vmatpush1.msra.mxu0 0.0
  %52 = vmatprep.subr.mxu0 0.0
  %53 = vmatpush1.msra.mxu0 %v23
  %54 = vmatprep.subr.mxu0 0.0
  %55 = vmatpush1.msra.mxu0 %v22
  %56 = vmatprep.subr.mxu0 0.0
  %57 = vmatpush1.msra.mxu0 %v21
  %58 = vmatprep.subr.mxu0 0.0
  %59 = vmatpush1.msra.mxu0 %v20
  %60 = vmatprep.subr.mxu0 0.0
  %61 = vmatpush2.msra.mxu0 0.0
  %62 = vmatprep.subr.mxu0 0.0
  %63 = vmatpush2.msra.mxu0 0.0
  %64 = vmatprep.subr.mxu0 0.0
  %65 = vmatpush2.msra.mxu0 0.0
  %66 = vmatprep.subr.mxu0 0.0
  %67 = vmatpush2.msra.mxu0 0.0
  %68 = vmatprep.subr.mxu0 0.0
  %69 = vmatpush2.msra.mxu0 0.0
  %70 = vmatprep.subr.mxu0 0.0
  %71 = vmatpush2.msra.mxu0 0.0
  %72 = vmatprep.subr.mxu0 0.0
  %73 = vmatpush2.msra.mxu0 0.0
  %74 = vmatprep.subr.mxu0 0.0
  %75 = vmatpush2.msra.mxu0 0.0
  %76 = vmatprep.subr.mxu0 0.0
  %77 = vmatpush2.msra.mxu0 0.0
  %78 = vmatprep.subr.mxu0 0.0
  %79 = vmatpush2.msra.mxu0 0.0
  %80 = vmatprep.subr.mxu0 0.0
  %81 = vmatpush2.msra.mxu0 0.0
  %82 = vmatprep.subr.mxu0 0.0
  %83 = vmatpush2.msra.mxu0 0.0
  %84 = vmatprep.subr.mxu0 0.0
  %85 = vmatpush2.msra.mxu0 0.0
  %86 = vmatprep.subr.mxu0 0.0
  %87 = vmatpush2.msra.mxu0 0.0
  %88 = vmatprep.subr.mxu0 0.0
  %89 = vmatpush2.msra.mxu0 0.0
  %90 = vmatprep.subr.mxu0 0.0
  %91 = vmatpush2.msra.mxu0 0.0
  %92 = vmatprep.mubr.f32.mxu0 0.0
  %93 = vmatmul.mubr.f32.gmra.mxu0 %v26
  %v94 = vpop.f32.mrf.mxu0
  %v95 = vadd.f32 0.0, %v94
  %v96 = vpop.f32.mrf.mxu0
  %97 = vdwg.mxu0
  %s98 = smul.u32 0, 8
  %v99 = vlaneseq
  %v100 = vshrl.u32 %v99, 7
  %v101 = vstv %s98
  %v102 = vadd.s32 %v101, %v100
  %s103 = smul.u32 0, 8
  %v104 = vlaneseq
  %v105 = vand.u32 %v104, 127
  %v106 = vstv %s103
  %v107 = vadd.s32 %v106, %v105
  %vm108 = vcmp.eq.s32.totalorder %v102, %v107
  %v109 = vmul.f32 %v95, 14.285714
  %v110 = vmul.f32 %v109, 1.442695
  %v111 = vpow.pop %v110
  %v112 = vsel %vm108, 0.0, %v111
  %v113 = vld [vmem:[#allocation2] sm:$0xff]
  %v114 = vadd.f32 %v113, %v112
  %vm115 = vcmask 64512
  %116 = vst.msk [vmem:[#allocation2] sm:$0xff] %vm115, %v114
  %p117 = scmp.eq.s32.totalorder 0, 0
  // Predicated region
  $region14: #{tpu_custom_call.1} parent=0 // pred_check
    %p118 = pneg %p117
  $region15: #{tpu_custom_call.1} parent=0 // pred_check_branch
    %120 = sbr.rel (%p118) target = $region17
  $region16: #{tpu_custom_call.1} parent=0 // pred_region
    %v121 = vsel %vm108, %v95, 0.0
    %v122 = vsel %vm115, %v121, 0.0
    %123 = vadd.xlane.f32.xlu0 %v122
    %v124 = vpop.xlane.xlu0 %123
    %v125 = vmul.f32 %v124, %v124
    %v126 = vsub.f32 1.0, %v125
    %v127 = vmax.f32 %v126, 0.0
    %v128 = vrsqrt.pop %v127
    %v129 = vmul.f32 %v127, %v128
    %vm130 = vcmp.eq.f32.partialorder %v127, inf
    %v131 = vsel %vm130, %v127, %v129
    %vm132 = vcmp.eq.f32.partialorder %v127, 0.0
    %v133 = vand.u32 %v127, 2147483648
    %v134 = vsel %vm132, %v133, %v131
    %v135 = vmul.f32 %v124, 0.87758255
    %v136 = vmul.f32 %v134, 0.47942555
    %v137 = vsub.f32 %v135, %v136
    %vm138 = vcmask 7168
    %139 = vst.msk [vmem:[#allocation3] sm:$0xff] %vm138, %v137
  $region17: #{tpu_custom_call.1} parent=0 // pred_fallthru
    _
  // Predicated region
  $region18: #{tpu_custom_call.1} parent=0 // pred_check
    %p140 = pneg %p11
  $region19: #{tpu_custom_call.1} parent=0 // pred_check_branch
    %142 = sbr.rel (%p140) target = $region21
  $region20: #{tpu_custom_call.1} parent=0 // pred_region
    %v143 = vld [vmem:[#allocation3] sm:$0xff]
    %v144 = vld [vmem:[#allocation2] sm:$0xff]
    %v145 = vsel %vm115, %v144, 0.0
    %146 = vadd.xlane.f32.xlu0 %v145
    %v147 = vpop.xlane.xlu0 %146
    %v148 = vmul.f32 %v143, 14.285714
    %v149 = vmul.f32 %v148, 1.442695
    %v150 = vpow.pop %v149
    %v151 = vadd.f32 %v147, %v150
    %v152 = vlog2.pop %v151
    %v153 = vmul.f32 %v152, 0.6931472
    %v154 = vsub.f32 %v153, %v148
    %vm155 = vcmask 7168
    %156 = vst.msk [vmem:[%s2] sm:$0xff] %vm155, %v154
  $region21: #{tpu_custom_call.1} parent=0 // pred_fallthru
    _
  // Predicated region
  $region22: #{tpu_custom_call.1} parent=0 // pred_check
    _
  $region23: #{tpu_custom_call.1} parent=0 // pred_check_branch
    %158 = sbr.rel (0) target = $region25
  $region24: #{tpu_custom_call.1} parent=0 // pred_region
    _
  $region25: #{tpu_custom_call.1} parent=0 // pred_fallthru
    _
  // Predicated region
  $region26: #{tpu_custom_call.1} parent=0 // pred_check
    _
  $region27: #{tpu_custom_call.1} parent=0 // pred_check_branch
    %160 = sbr.rel (0) target = $region29
  $region28: #{tpu_custom_call.1} parent=0 // pred_region
    _
  $region29: #{tpu_custom_call.1} parent=0 // pred_fallthru
    _

</llo_original>
